<compile_context>
chip_gen: v7x
topology: tpu7x:2x2x1
jax: 0.10.0
libtpu: 0.0.40
codegen_flags: <defaults>
</compile_context>

<pallas_src>
import jax
import jax.numpy as jnp
from jax.experimental import pallas as pl
from jax.experimental.pallas import tpu as pltpu


_LANE_WIDTHS = (4096, 2048, 1024, 512, 256, 128)  # preferred slab widths, widest first


def _log_x_plus_1_kernel(x_ref, o_ref):
    # ln(x + 1): add is free VPU filler, log goes to the EUP (its own bundle
    # slot), so the kernel stays HBM-bound; casts are free relative to HBM.
    x = x_ref[...].astype(jnp.float32)
    o_ref[...] = jnp.log(x + 1.0).astype(o_ref.dtype)


def _chip_config():
    """Returns (target block bytes, multi-TensorCore chip?)."""
    try:
        kind = jax.devices()[0].device_kind.lower()
    except Exception:
        kind = ""
    if "v7" in kind:
        return 6 * 1024 * 1024, True    # 24 MiB pipelined working set
    if "v6" in kind:
        return 4 * 1024 * 1024, False   # 16 MiB pipelined working set
    return 2 * 1024 * 1024, False       # v5e (16 MiB scoped default) & fallback


def _choose_width(n: int) -> int:
    """Widest lane-dense last dim that divides n exactly (0 if none)."""
    for w in _LANE_WIDTHS:
        if n % w == 0:
            return w
    return 0


def _round_rows(br: int) -> int:
    """Round a row-tile down to a packing-friendly sublane multiple."""
    if br >= 32:
        return (br // 32) * 32
    return max(8, (br // 8) * 8)


def _choose_block_rows(rows: int, width: int, itemsize: int,
                       block_bytes: int, multi_core: bool) -> int:
    """Pick a row tile: ~block_bytes-sized blocks, >=2 blocks on 2-TC chips."""
    row_bytes = width * itemsize
    slab_bytes = rows * row_bytes
    br = max(1, block_bytes // row_bytes)

    if br >= rows:
        # Whole slab fits in one block. On multi-TC chips split mid-sized
        # slabs (> ~4 MiB) so both TensorCores get work.
        if not (multi_core and slab_bytes > 4 * 1024 * 1024 and rows >= 64):
            return rows                  # single full-height block (full-dim rule)
        br = _round_rows(pl.cdiv(rows, 2))
    else:
        br = _round_rows(br)

    br = max(8, min(br, rows))

    if multi_core:
        n_blocks = pl.cdiv(rows, br)
        # Prefer an even step count for small grids so the final wave does
        # not leave one TensorCore idle.
        if n_blocks % 2 == 1 and 1 < n_blocks < 16:
            br2 = _round_rows(pl.cdiv(rows, n_blocks + 1))
            if br2 >= 8 and pl.cdiv(rows, br2) % 2 == 0:
                br = br2
    return br


def _run_slab(x2d: jax.Array) -> jax.Array:
    rows, width = x2d.shape
    itemsize = x2d.dtype.itemsize
    block_bytes, multi_core = _chip_config()
    block_rows = _choose_block_rows(rows, width, itemsize, block_bytes, multi_core)
    n = rows * width
    return pl.pallas_call(
        _log_x_plus_1_kernel,
        out_shape=jax.ShapeDtypeStruct((rows, width), x2d.dtype),
        grid=(pl.cdiv(rows, block_rows),),  # ragged last block -> Pallas padding
        in_specs=[pl.BlockSpec((block_rows, width), lambda i: (i, 0))],
        out_specs=pl.BlockSpec((block_rows, width), lambda i: (i, 0)),
        compiler_params=pltpu.CompilerParams(
            dimension_semantics=("parallel",)),
        cost_estimate=pl.CostEstimate(
            flops=n, transcendentals=n, bytes_accessed=2 * n * itemsize),
    )(x2d)


def log_x_plus_1(x: jax.Array) -> jax.Array:
    """Elementwise ln(x + 1) via a Pallas TPU kernel. Accepts any real shape."""
    orig_shape = x.shape
    dtype = x.dtype
    n = x.size
    if n == 0:
        return x

    x_flat = jnp.ravel(x)                 # free (bitcast) for contiguous inputs
    width = _choose_width(n)

    if width:
        # Common case: exact reshape, no padding, no post-slice.
        out2d = _run_slab(x_flat.reshape(n // width, width))
        return out2d.reshape(orig_shape)

    # Rare fallback: n is not a multiple of 128. Stream the 128-aligned head
    # through the kernel and finish the (<128-element) tail with plain jnp —
    # avoids the pad-concatenate + full post-slice extra HBM passes.
    main = n - (n % 128)
    tail_out = jnp.log(x_flat[main:].astype(jnp.float32) + 1.0).astype(dtype)
    if main == 0:
        return tail_out.reshape(orig_shape)
    w = _choose_width(main)
    main_out = _run_slab(x_flat[:main].reshape(main // w, w)).reshape(-1)
    return jnp.concatenate([main_out, tail_out]).reshape(orig_shape)


if __name__ == "__main__":
    key = jax.random.PRNGKey(0)

    # Magnitude-like (non-negative) NCHW input, small shape (2, 4, 16, 16).
    x = jnp.abs(jax.random.normal(key, (2, 4, 16, 16), dtype=jnp.float32))
    out = jax.block_until_ready(log_x_plus_1(x))
    ref = jnp.log(x + 1.0)
    assert out.shape == x.shape and out.dtype == x.dtype
    assert jnp.allclose(out, ref, atol=1e-6, rtol=1e-6)

    # Exercise the non-multiple-of-128 fallback paths (kernel + tail, tail-only).
    x2 = jnp.abs(jax.random.normal(jax.random.PRNGKey(1), (8, 129), dtype=jnp.float32))
    out2 = jax.block_until_ready(log_x_plus_1(x2))
    assert jnp.allclose(out2, jnp.log(x2 + 1.0), atol=1e-6, rtol=1e-6)

    x3 = jnp.abs(jax.random.normal(jax.random.PRNGKey(2), (3, 5, 7), dtype=jnp.float32))
    out3 = jax.block_until_ready(log_x_plus_1(x3))
    assert jnp.allclose(out3, jnp.log(x3 + 1.0), atol=1e-6, rtol=1e-6)

    print("KERNEL_OK")
</pallas_src>

<mosaic_0001>
module attributes {stable_mosaic.version = 11 : i64} {
  func.func @_log_x_plus_1_kernel(%arg0: i32, %arg1: memref<1x2048xf32, #tpu.memory_space<vmem>>, %arg2: memref<1x2048xf32, #tpu.memory_space<vmem>>) attributes {dimension_semantics = [#tpu.dimension_semantics<parallel>], iteration_bounds = array<i64: 1>, scalar_prefetch = 0 : i64, scratch_operands = 0 : i64, tpu.core_type = #tpu.core_type<tc>, window_params = [{transform_indices = @transform_0, window_bounds = array<i64: 1, 2048>}, {transform_indices = @transform_1, window_bounds = array<i64: 1, 2048>}]} {
    %c0 = arith.constant 0 : index
    %c0_0 = arith.constant 0 : index
    %0 = vector.load %arg1[%c0, %c0_0] : memref<1x2048xf32, #tpu.memory_space<vmem>>, vector<1x2048xf32>
    %cst = arith.constant 1.000000e+00 : f32
    %1 = vector.broadcast %cst : f32 to vector<1x2048xf32>
    %2 = arith.addf %0, %1 : vector<1x2048xf32>
    %3 = math.log %2 : vector<1x2048xf32>
    %c0_1 = arith.constant 0 : index
    %c0_2 = arith.constant 0 : index
    %4 = vector.load %arg2[%c0_1, %c0_2] : memref<1x2048xf32, #tpu.memory_space<vmem>>, vector<1x2048xf32>
    tpu.vector_store %arg2[%c0_1, %c0_2], %3 {strides = array<i32>} : memref<1x2048xf32, #tpu.memory_space<vmem>>, vector<1x2048xf32>,
    return
  }
  func.func @transform_0(%arg0: i32) -> (i32, i32) {
    %c0_i32 = arith.constant 0 : i32
    %c0_i32_0 = arith.constant 0 : i32
    return %arg0, %c0_i32 : i32, i32
  }
  func.func @transform_1(%arg0: i32) -> (i32, i32) {
    %c0_i32 = arith.constant 0 : i32
    %c0_i32_0 = arith.constant 0 : i32
    return %arg0, %c0_i32 : i32, i32
  }
}

</mosaic_0001>

<llo_original>
// kernel: tpu_custom_call.1
$region0: #{tpu_custom_call.1}
  #allocation0 [shape = 'u32[]', space=smem, size = 0x4, offset = 0x4, fixed_abs, tag = 'smem constant byte address 0x4 - core index']
  #allocation1 [shape = 'u32[144,128]{1,0:T(1,128)}', space=vmem, size = 0x12000, scoped, tag = 'internal scratch']
  %s0 = inlined_call_operand.hbm [shape: f32[1,2048], index: 0, kind: input, shape index: {}]
  %s1 = inlined_call_operand.hbm [shape: f32[1,2048], index: 1, kind: output, shape index: {}]
  %s2 = sld [smem:[#allocation0]]
  $region18: #{tpu_custom_call.1} parent=0
    _
  %s4 = ssub.s32 1, %s2
  %s5 = scalar_select 0, %s4, %s2
  $region1: #{tpu_custom_call.1} parent=0
    #allocation2 [shape = 'u8[8192]{0}', space=vmem, size = 0x2000, scoped, tag = 'input window, operand 0, single buffered']
    #allocation3 [shape = 's32[1]{0}', space=sflag, size = 0x4, scoped, tag = 'scoped memory for tpu_custom_call.1']
    #allocation4 [shape = 's32[1]{0}', space=sflag, size = 0x4, scoped, tag = 'scoped memory for tpu_custom_call.1']
    #allocation5 [shape = 'u8[8192]{0}', space=vmem, size = 0x2000, scoped, tag = 'output window, operand 0, single buffered']
    %6 = vsyncpa [#allocation3], 0
    %7 = vsyncpa [#allocation4], 0
    // Predicated region
    $region2: #{tpu_custom_call.1} parent=1 // pred_check
      _
    $region3: #{tpu_custom_call.1} parent=1 // pred_check_branch
      %9 = sbr.rel (0) target = $region5
    $region4: #{tpu_custom_call.1} parent=1 // pred_region
      %s11 = ssub.s32 256, 256
      %12 = vsyncadd [#allocation3], %s11
      %s14 = sshll.u32 [#allocation2], 4
      %s15 = int_to_ptr.vmem [resolvable:$true] %s14
      %17 = dma.hbm_to_vmem [thread:$0]  %s0, 256, %s15, [#allocation3]
    $region5: #{tpu_custom_call.1} parent=1 // pred_fallthru
      _
    // Predicated region
    $region6: #{tpu_custom_call.1} parent=1 // pred_check
      _
    $region7: #{tpu_custom_call.1} parent=1 // pred_check_branch
      %19 = sbr.rel (0) target = $region9
    $region8: #{tpu_custom_call.1} parent=1 // pred_region
      %20 = dma.done [#allocation3], 256
    $region9: #{tpu_custom_call.1} parent=1 // pred_fallthru
      _
    %v21 = vld [vmem:[#allocation2] sm:$0xff]
    %v22 = vld [vmem:[#allocation2 + $0x8] sm:$0xff]
    %v23 = vadd.f32 %v21, 1.0
    %v24 = vadd.f32 %v22, 1.0
    %v25 = vlog2.pop %v23
    %v26 = vmul.f32 %v25, 0.6931472
    %v27 = vlog2.pop %v24
    %v28 = vmul.f32 %v27, 0.6931472
    %29 = vst [vmem:[#allocation5] sm:$0xff] %v26
    %30 = vst [vmem:[#allocation5 + $0x8] sm:$0xff] %v28
    // Predicated region
    $region10: #{tpu_custom_call.1} parent=1 // pred_check
      _
    $region11: #{tpu_custom_call.1} parent=1 // pred_check_branch
      %32 = sbr.rel (0) target = $region13
    $region12: #{tpu_custom_call.1} parent=1 // pred_region
      %s34 = ssub.s32 256, 256
      %35 = vsyncadd [#allocation4], %s34
      %s37 = sshll.u32 [#allocation5], 4
      %s38 = int_to_ptr.vmem [resolvable:$true] %s37
      %40 = dma.vmem_to_hbm [thread:$0]  %s38, 256, %s1, [#allocation4]
    $region13: #{tpu_custom_call.1} parent=1 // pred_fallthru
      _
    // Predicated region
    $region14: #{tpu_custom_call.1} parent=1 // pred_check
      _
    $region15: #{tpu_custom_call.1} parent=1 // pred_check_branch
      %42 = sbr.rel (0) target = $region17
    $region16: #{tpu_custom_call.1} parent=1 // pred_region
      %43 = dma.done [#allocation4], 256
    $region17: #{tpu_custom_call.1} parent=1 // pred_fallthru
      _
    %44 = vsyncpa [#allocation3], 1
    %45 = vsyncpa [#allocation4], 1

</llo_original>
